<compile_context>
chip_gen: v7x
topology: tpu7x:2x2x1
jax: 0.10.0
libtpu: 0.0.40
codegen_flags: <defaults>
</compile_context>

<pallas_src>
import functools

import jax
import jax.numpy as jnp
from jax.experimental import pallas as pl
from jax.experimental.pallas import tpu as pltpu

_LANE = 128
_TILE_TARGET_BYTES = 4 << 20   # ~4 MiB blocks (1 MiB leaves 20-35% step overhead on v7x)
_MIN_KERNEL_ELEMS = 8 * _LANE  # below this a kernel launch is not worth it


def _round_up(a, m):
    return ((a + m - 1) // m) * m


def _choose_lane_width(n):
    # Widest lane dimension (multiple of 128) that divides n -> no padding.
    for c in (2048, 1024, 512, 256, 128):
        if n % c == 0:
            return c
    return _LANE


def _tpu_vmem_capacity_bytes():
    try:
        info = pltpu.get_tpu_info()
        cap = getattr(info, "vmem_capacity_bytes", None)
        if cap:
            return int(cap)
    except Exception:
        pass
    return 64 << 20  # conservative (v7x per-core VMEM)


def _prng_noise_kernel(seed_ref, x_ref, o_ref, *, sigma):
    """TPU path: draw N(0,1) in-kernel with the hardware PRNG."""
    # Two seed words (base, tile id): per-tile streams without feeding the PRNG
    # adjacent integers.
    pltpu.prng_seed(seed_ref[0], pl.program_id(0))
    # TODO(synk): on v7x the transcendentals of the uniform->normal transform run
    # on the single EUP slot and can become the binding unit at 3.2 TB/s HBM; if
    # a bundle dump shows EUP saturating, switch to prng_random_bits + a cheap
    # VPU-only transform.
    noise = pltpu.stateful_normal(x_ref.shape, jnp.float32)
    # out = x * (1 + sigma * n); big multiply in the native dtype so bf16
    # activations stay bf16 on the VPU (halves vector work on v6e/v7x).
    factor = (1.0 + sigma * noise).astype(o_ref.dtype)
    o_ref[...] = x_ref[...] * factor


def _fma_noise_kernel(x_ref, n_ref, o_ref, *, sigma):
    """Fallback path (non-TPU backends only): noise precomputed outside."""
    factor = (1.0 + sigma * n_ref[...].astype(jnp.float32)).astype(o_ref.dtype)
    o_ref[...] = x_ref[...] * factor


def _run_pallas(x2d, seed, sigma, tile_target_bytes, donate_input):
    R, C = x2d.shape
    dtype = x2d.dtype
    itemsize = dtype.itemsize

    # Scoped-VMEM budget: raise the default (16 MiB on v5e) but stay well under
    # physical (128 MiB v5e/v6e, 64 MiB per-TC v7x).
    vmem_cap = _tpu_vmem_capacity_bytes()
    vmem_limit = int(min((vmem_cap * 3) // 4, 100 << 20))
    # ~10x tile bytes must fit: in+out double-buffered (4x) + f32 intermediates.
    tile_target = max(_LANE * 8 * itemsize, min(tile_target_bytes, vmem_limit // 10))

    row_align = max(8, 32 // itemsize)  # native sublane tiling: 8 f32 / 16 bf16 / 32 int8
    tile_r = max(1, tile_target // (C * itemsize))
    if tile_r >= R:
        if R >= 2 * row_align:
            # Whole tensor would fit in one block; split into two so the
            # "parallel" grid axis can use both v7x TensorCores.
            tile_r = _round_up(pl.cdiv(R, 2), row_align)
        else:
            tile_r = R  # full-extent block is always legal
    else:
        tile_r = max(row_align, (tile_r // row_align) * row_align)
    grid = (pl.cdiv(R, tile_r),)

    block = pl.BlockSpec((tile_r, C), lambda i: (i, 0))
    cparams = pltpu.CompilerParams(
        dimension_semantics=("parallel",),
        vmem_limit_bytes=vmem_limit,
    )

    if jax.default_backend() == "tpu":
        seed_arr = jnp.asarray([seed], dtype=jnp.int32)
        call_kwargs = dict(
            out_shape=jax.ShapeDtypeStruct((R, C), dtype),
            grid=grid,
            in_specs=[pl.BlockSpec(memory_space=pltpu.SMEM), block],
            out_specs=block,
            compiler_params=cparams,
        )
        if donate_input:
            call_kwargs["input_output_aliases"] = {1: 0}
        return pl.pallas_call(
            functools.partial(_prng_noise_kernel, sigma=float(sigma)),
            **call_kwargs,
        )(seed_arr, x2d)

    # Non-TPU fallback (pltpu.prng_seed has no CPU lowering): precomputed noise.
    # Never taken on a TPU backend -- it adds a full extra HBM stream.
    noise2d = jax.random.normal(
        jax.random.PRNGKey(int(seed)), (R, C), jnp.float32).astype(dtype)
    call_kwargs = dict(
        out_shape=jax.ShapeDtypeStruct((R, C), dtype),
        grid=grid,
        in_specs=[block, block],
        out_specs=block,
        compiler_params=cparams,
    )
    if donate_input:
        call_kwargs["input_output_aliases"] = {0: 0}
    return pl.pallas_call(
        functools.partial(_fma_noise_kernel, sigma=float(sigma)),
        **call_kwargs,
    )(x2d, noise2d)


def _small_jax_path(x, seed, sigma):
    noise = jax.random.normal(jax.random.PRNGKey(int(seed)), x.shape, jnp.float32)
    return (x.astype(jnp.float32) * (1.0 + sigma * noise)).astype(x.dtype)


def _noisy_impl(x, seed, sigma, tile_target_bytes, donate_input):
    orig_shape = x.shape
    dtype = x.dtype
    n = x.size
    if n == 0:
        return x
    if n < _MIN_KERNEL_ELEMS:
        # Tiny tensors: a kernel launch costs more than the math.
        return _small_jax_path(x, seed, sigma)

    flat = x.reshape(-1)
    C = _choose_lane_width(n)
    bulk = (n // C) * C

    if bulk == n:
        head2d = flat.reshape(n // C, C)
    else:
        head2d = flat[:bulk].reshape(bulk // C, C)
    out_head = _run_pallas(head2d, seed, sigma, tile_target_bytes, donate_input)

    if bulk == n:
        return out_head.reshape(orig_shape)

    # Ragged tail (< 128 elements): plain JAX; avoids the full-tensor pad and
    # output-slice HBM passes of the previous version.
    # TODO(synk): an in-kernel masked tail (pl.ANY + manual DMA) would also
    # remove this small slice/concatenate.
    tail = flat[bulk:]
    tnoise = jax.random.normal(
        jax.random.PRNGKey(int(seed) ^ 0x5DEECE6), tail.shape, jnp.float32)
    out_tail = (tail.astype(jnp.float32) * (1.0 + sigma * tnoise)).astype(dtype)
    return jnp.concatenate([out_head.reshape(-1), out_tail]).reshape(orig_shape)


@functools.partial(jax.custom_vjp, nondiff_argnums=(1, 2, 3, 4))
def _noisy(x, seed, sigma, tile_target_bytes, donate_input):
    return _noisy_impl(x, seed, sigma, tile_target_bytes, donate_input)


def _noisy_fwd(x, seed, sigma, tile_target_bytes, donate_input):
    return _noisy_impl(x, seed, sigma, tile_target_bytes, donate_input), None


def _noisy_bwd(seed, sigma, tile_target_bytes, donate_input, _residuals, g):
    # GaussianNoise detaches the noise scale (is_relative_detach=True default),
    # so the backward is the identity -- matches PyTorch.
    return (g,)


_noisy.defvjp(_noisy_fwd, _noisy_bwd)


def gaussian_noise(x, seed, *, sigma=0.1, training=True, is_relative_detach=True,
                   tile_target_bytes=_TILE_TARGET_BYTES, donate_input=False):
    """Relative Gaussian noise: x * (1 + sigma * N(0,1)); identity in eval mode.

    donate_input=True adds input_output_aliases so XLA can update x in place
    when the caller donates it; leave False otherwise (aliasing without
    donation forces an extra copy of x).
    """
    # TODO(synk): is_relative_detach=False only changes the backward (scale not
    # detached -> grad = 1 + sigma*noise); only the default detach=True gradient
    # is implemented (identity backward via custom_vjp). Forward values match.
    del is_relative_detach
    if not training or sigma == 0:
        return x
    return _noisy(x, int(seed), float(sigma), int(tile_target_bytes),
                  bool(donate_input))


if __name__ == "__main__":
    key = jax.random.PRNGKey(0)
    k1, k2, k3, k4 = jax.random.split(key, 4)

    # Small NCHW activation tensor, consistent with the CNN feature maps.
    x = jax.random.normal(k1, (2, 4, 16, 16), dtype=jnp.float32)
    y = jax.block_until_ready(gaussian_noise(x, seed=42, sigma=0.1, training=True))
    assert y.shape == x.shape and y.dtype == x.dtype
    assert bool(jnp.any(jnp.abs(y - x) > 0))
    # Relative noise bound (very loose, ~8 sigma): |y - x| <= |sigma * x| * 8.
    assert bool(jnp.all(jnp.abs(y - x) <= jnp.abs(0.1 * x) * 8.0 + 1e-6))

    # Relative noise => zeros stay exactly zero.
    z = jnp.zeros((4, 8, 128), jnp.float32)
    yz = jax.block_until_ready(gaussian_noise(z, seed=7, sigma=0.1, training=True))
    assert bool(jnp.all(yz == 0))

    # Awkward (non-multiple-of-128) size exercises the small/ragged path
    # (no full-tensor pad/slice).
    w = jax.random.normal(k2, (3, 5, 7), dtype=jnp.float32)
    yw = jax.block_until_ready(gaussian_noise(w, seed=3, sigma=0.1, training=True))
    assert yw.shape == w.shape and yw.dtype == w.dtype
    assert bool(jnp.all(jnp.abs(yw - w) <= jnp.abs(0.1 * w) * 8.0 + 1e-6))

    # Multi-block grid (forced small tiles) + check tiles get DIFFERENT noise.
    x3 = jax.random.normal(k3, (4, 8, 32, 32), dtype=jnp.float32)
    y3 = jax.block_until_ready(
        gaussian_noise(x3, seed=11, sigma=0.1, training=True,
                       tile_target_bytes=32 * 1024))
    rel = ((y3 - x3) / (0.1 * x3)).reshape(-1)
    half = rel.shape[0] // 2
    assert not bool(jnp.allclose(rel[:half], rel[half:]))

    # bf16 path (native-dtype multiply) + input_output_aliases exercised.
    xb = jax.random.normal(k4, (2, 8, 64, 128), dtype=jnp.bfloat16)
    yb = jax.block_until_ready(
        gaussian_noise(xb, seed=9, sigma=0.05, training=True, donate_input=True))
    assert yb.shape == xb.shape and yb.dtype == jnp.bfloat16
    assert bool(jnp.all(jnp.isfinite(yb.astype(jnp.float32))))

    # Gradient matches PyTorch's detached-scale semantics: d(out)/dx == 1.
    g = jax.grad(lambda v: jnp.sum(gaussian_noise(v, seed=5, sigma=0.1,
                                                  training=True)))(x)
    assert bool(jnp.allclose(g, 1.0))

    # Eval mode is the identity.
    y_eval = jax.block_until_ready(gaussian_noise(x, seed=42, sigma=0.1,
                                                  training=False))
    assert bool(jnp.all(y_eval == x))

    print("KERNEL_OK")
</pallas_src>

<mosaic_0001>
module attributes {stable_mosaic.version = 11 : i64} {
  func.func @_fma_noise_kernel(%arg0: i32, %arg1: memref<1x2048xf32, #tpu.memory_space<vmem>>, %arg2: memref<1x2048xf32, #tpu.memory_space<vmem>>, %arg3: memref<1x2048xf32, #tpu.memory_space<vmem>>) attributes {dimension_semantics = [#tpu.dimension_semantics<parallel>], iteration_bounds = array<i64: 1>, scalar_prefetch = 0 : i64, scratch_operands = 0 : i64, tpu.core_type = #tpu.core_type<tc>, window_params = [{transform_indices = @transform_0, window_bounds = array<i64: 1, 2048>}, {transform_indices = @transform_1, window_bounds = array<i64: 1, 2048>}, {transform_indices = @transform_2, window_bounds = array<i64: 1, 2048>}]} {
    %c0 = arith.constant 0 : index
    %c0_0 = arith.constant 0 : index
    %0 = vector.load %arg2[%c0, %c0_0] : memref<1x2048xf32, #tpu.memory_space<vmem>>, vector<1x2048xf32>
    %cst = arith.constant 1.000000e-01 : f32
    %1 = vector.broadcast %cst : f32 to vector<1x2048xf32>
    %2 = arith.mulf %1, %0 : vector<1x2048xf32>
    %cst_1 = arith.constant 1.000000e+00 : f32
    %3 = vector.broadcast %cst_1 : f32 to vector<1x2048xf32>
    %4 = arith.addf %3, %2 : vector<1x2048xf32>
    %c0_2 = arith.constant 0 : index
    %c0_3 = arith.constant 0 : index
    %5 = vector.load %arg1[%c0_2, %c0_3] : memref<1x2048xf32, #tpu.memory_space<vmem>>, vector<1x2048xf32>
    %6 = arith.mulf %5, %4 : vector<1x2048xf32>
    %c0_4 = arith.constant 0 : index
    %c0_5 = arith.constant 0 : index
    %7 = vector.load %arg3[%c0_4, %c0_5] : memref<1x2048xf32, #tpu.memory_space<vmem>>, vector<1x2048xf32>
    tpu.vector_store %arg3[%c0_4, %c0_5], %6 {strides = array<i32>} : memref<1x2048xf32, #tpu.memory_space<vmem>>, vector<1x2048xf32>,
    return
  }
  func.func @transform_0(%arg0: i32) -> (i32, i32) {
    %c0_i32 = arith.constant 0 : i32
    %c0_i32_0 = arith.constant 0 : i32
    return %arg0, %c0_i32 : i32, i32
  }
  func.func @transform_1(%arg0: i32) -> (i32, i32) {
    %c0_i32 = arith.constant 0 : i32
    %c0_i32_0 = arith.constant 0 : i32
    return %arg0, %c0_i32 : i32, i32
  }
  func.func @transform_2(%arg0: i32) -> (i32, i32) {
    %c0_i32 = arith.constant 0 : i32
    %c0_i32_0 = arith.constant 0 : i32
    return %arg0, %c0_i32 : i32, i32
  }
}

</mosaic_0001>

<llo_original>
// kernel: tpu_custom_call.1
$region0: #{tpu_custom_call.1}
  #allocation0 [shape = 'u32[]', space=smem, size = 0x4, offset = 0x4, fixed_abs, tag = 'smem constant byte address 0x4 - core index']
  #allocation1 [shape = 'u32[144,128]{1,0:T(1,128)}', space=vmem, size = 0x12000, scoped, tag = 'internal scratch']
  %s0 = inlined_call_operand.hbm [shape: f32[1,2048], index: 0, kind: input, shape index: {}]
  %s1 = inlined_call_operand.hbm [shape: f32[1,2048], index: 1, kind: input, shape index: {}]
  %s2 = inlined_call_operand.hbm [shape: f32[1,2048], index: 2, kind: output, shape index: {}]
  %s3 = sld [smem:[#allocation0]]
  $region26: #{tpu_custom_call.1} parent=0
    _
  %s5 = ssub.s32 1, %s3
  %s6 = scalar_select 0, %s5, %s3
  $region1: #{tpu_custom_call.1} parent=0
    #allocation2 [shape = 'u8[8192]{0}', space=vmem, size = 0x2000, scoped, tag = 'input window, operand 0, single buffered']
    #allocation3 [shape = 's32[1]{0}', space=sflag, size = 0x4, scoped, tag = 'scoped memory for tpu_custom_call.1']
    #allocation4 [shape = 's32[1]{0}', space=sflag, size = 0x4, scoped, tag = 'scoped memory for tpu_custom_call.1']
    #allocation5 [shape = 'u8[8192]{0}', space=vmem, size = 0x2000, scoped, tag = 'input window, operand 1, single buffered']
    #allocation6 [shape = 's32[1]{0}', space=sflag, size = 0x4, scoped, tag = 'scoped memory for tpu_custom_call.1']
    #allocation7 [shape = 'u8[8192]{0}', space=vmem, size = 0x2000, scoped, tag = 'output window, operand 0, single buffered']
    %7 = vsyncpa [#allocation3], 0
    %8 = vsyncpa [#allocation6], 0
    %9 = vsyncpa [#allocation4], 0
    // Predicated region
    $region2: #{tpu_custom_call.1} parent=1 // pred_check
      _
    $region3: #{tpu_custom_call.1} parent=1 // pred_check_branch
      %11 = sbr.rel (0) target = $region5
    $region4: #{tpu_custom_call.1} parent=1 // pred_region
      %s13 = ssub.s32 256, 256
      %14 = vsyncadd [#allocation3], %s13
      %s16 = sshll.u32 [#allocation2], 4
      %s17 = int_to_ptr.vmem [resolvable:$true] %s16
      %19 = dma.hbm_to_vmem [thread:$0]  %s0, 256, %s17, [#allocation3]
    $region5: #{tpu_custom_call.1} parent=1 // pred_fallthru
      _
    // Predicated region
    $region6: #{tpu_custom_call.1} parent=1 // pred_check
      _
    $region7: #{tpu_custom_call.1} parent=1 // pred_check_branch
      %21 = sbr.rel (0) target = $region9
    $region8: #{tpu_custom_call.1} parent=1 // pred_region
      %s23 = ssub.s32 256, 256
      %24 = vsyncadd [#allocation6], %s23
      %s26 = sshll.u32 [#allocation5], 4
      %s27 = int_to_ptr.vmem [resolvable:$true] %s26
      %29 = dma.hbm_to_vmem [thread:$0]  %s1, 256, %s27, [#allocation6]
    $region9: #{tpu_custom_call.1} parent=1 // pred_fallthru
      _
    // Predicated region
    $region10: #{tpu_custom_call.1} parent=1 // pred_check
      _
    $region11: #{tpu_custom_call.1} parent=1 // pred_check_branch
      %31 = sbr.rel (0) target = $region13
    $region12: #{tpu_custom_call.1} parent=1 // pred_region
      %32 = dma.done [#allocation3], 256
    $region13: #{tpu_custom_call.1} parent=1 // pred_fallthru
      _
    // Predicated region
    $region14: #{tpu_custom_call.1} parent=1 // pred_check
      _
    $region15: #{tpu_custom_call.1} parent=1 // pred_check_branch
      %34 = sbr.rel (0) target = $region17
    $region16: #{tpu_custom_call.1} parent=1 // pred_region
      %35 = dma.done [#allocation6], 256
    $region17: #{tpu_custom_call.1} parent=1 // pred_fallthru
      _
    %v36 = vld [vmem:[#allocation5] sm:$0xff]
    %v37 = vld [vmem:[#allocation5 + $0x8] sm:$0xff]
    %v38 = vmul.f32 %v36, 0.1
    %v39 = vmul.f32 %v37, 0.1
    %v40 = vadd.f32 %v38, 1.0
    %v41 = vadd.f32 %v39, 1.0
    %v42 = vld [vmem:[#allocation2] sm:$0xff]
    %v43 = vld [vmem:[#allocation2 + $0x8] sm:$0xff]
    %v44 = vmul.f32 %v42, %v40
    %v45 = vmul.f32 %v43, %v41
    %46 = vst [vmem:[#allocation7] sm:$0xff] %v44
    %47 = vst [vmem:[#allocation7 + $0x8] sm:$0xff] %v45
    // Predicated region
    $region18: #{tpu_custom_call.1} parent=1 // pred_check
      _
    $region19: #{tpu_custom_call.1} parent=1 // pred_check_branch
      %49 = sbr.rel (0) target = $region21
    $region20: #{tpu_custom_call.1} parent=1 // pred_region
      %s51 = ssub.s32 256, 256
      %52 = vsyncadd [#allocation4], %s51
      %s54 = sshll.u32 [#allocation7], 4
      %s55 = int_to_ptr.vmem [resolvable:$true] %s54
      %57 = dma.vmem_to_hbm [thread:$0]  %s55, 256, %s2, [#allocation4]
    $region21: #{tpu_custom_call.1} parent=1 // pred_fallthru
      _
    // Predicated region
    $region22: #{tpu_custom_call.1} parent=1 // pred_check
      _
    $region23: #{tpu_custom_call.1} parent=1 // pred_check_branch
      %59 = sbr.rel (0) target = $region25
    $region24: #{tpu_custom_call.1} parent=1 // pred_region
      %60 = dma.done [#allocation4], 256
    $region25: #{tpu_custom_call.1} parent=1 // pred_fallthru
      _
    %61 = vsyncpa [#allocation3], 1
    %62 = vsyncpa [#allocation6], 1
    %63 = vsyncpa [#allocation4], 1

</llo_original>
